<compile_context>
chip_gen: v7x
topology: tpu7x:2x2x1
jax: 0.10.0
libtpu: 0.0.40
codegen_flags: <defaults>
</compile_context>

<pallas_src>
import functools

import jax
import jax.numpy as jnp
from jax import lax
from jax.experimental import pallas as pl
from jax.experimental.pallas import tpu as pltpu

_MIB = 1024 * 1024


# ---------------------------------------------------------------------------
# Small helpers
# ---------------------------------------------------------------------------
def _round_up(v, m):
    return ((v + m - 1) // m) * m


def _round_down(v, m):
    return (v // m) * m


def _sublane(itemsize):
    # f32 -> 8 sublanes per vreg, bf16 -> 16, int8/fp8 -> 32 (sub-32-bit packing).
    return max(8, 32 // itemsize)


def _vmem_capacity_bytes():
    try:
        return int(pltpu.get_tpu_info().vmem_capacity_bytes)
    except Exception:
        return 128 * _MIB  # v5e/v6e-style default if the query is unavailable


# ---------------------------------------------------------------------------
# Kernel
# ---------------------------------------------------------------------------
def _single_layer_nn_kernel(x_ref, w_ref, b_ref, o_ref, acc_ref, *,
                            inv_hw, hw, hw_tile, mask_tail):
    # x_ref  : (TN, C, HW_TILE) input dtype (streamed, double-buffered)
    # w_ref  : (C, NC_PAD)      pre-transposed weight (resident)
    # b_ref  : (1, NC_PAD)      bias (resident)
    # o_ref  : (TN, NC_PAD)     logits for this batch block
    # acc_ref: (TN, C) f32 scratch -- running spatial SUM, resident across k.
    k = pl.program_id(1)

    @pl.when(k == 0)
    def _():
        acc_ref[...] = jnp.zeros_like(acc_ref)

    x = x_ref[...]
    if mask_tail:
        # HW is not a multiple of hw_tile: zero the out-of-range lanes of the
        # partial tail chunk.  The iota/compare/select ride the VALU which has
        # huge slack here, and they are a no-op on non-tail chunks.
        pos = k * hw_tile + lax.broadcasted_iota(jnp.int32, x.shape, dimension=2)
        x = jnp.where(pos < hw, x, jnp.zeros_like(x))

    # Partial global-average-pool: f32 running SUM over this spatial chunk.
    acc_ref[...] += jnp.sum(x, axis=-1, dtype=jnp.float32)

    @pl.when(k == pl.num_programs(1) - 1)
    def _():
        # Divide by the TRUE H*W once at finalize (not per chunk).
        pooled = acc_ref[...] * jnp.float32(inv_hw)                      # (TN, C)
        # Feed the MXU in the weight's native dtype (bf16 x bf16 -> f32 path
        # when the weights are bf16); accumulation stays f32.
        logits = jnp.dot(pooled.astype(w_ref.dtype), w_ref[...],
                         preferred_element_type=jnp.float32)             # (TN, NC_PAD)
        o_ref[...] = (logits + b_ref[...].astype(jnp.float32)).astype(o_ref.dtype)


# ---------------------------------------------------------------------------
# Joint, padding-aware tile selection
# ---------------------------------------------------------------------------
def _pick_tiles(n, c, hw, itemsize, budget_bytes, max_batch_tile):
    """Choose (tn, hw_tile) jointly against a per-x-buffer VMEM budget.

    Priorities:
      * shrink tn (multiples of 8) BEFORE shrinking hw_tile so the contiguous
        per-(n, c) HBM DMA segment stays long,
      * byte math uses the padded VMEM tile: round_up(C, sublane) sublanes and
        round_up(lanes, 128) lanes,
      * guarantee >= 2 batch blocks when N >= 16 (megacore work for v7x).
    """
    c_pad = _round_up(c, _sublane(itemsize))
    lane_min = 128  # minimum lane footprint of any VMEM block

    tn = min(n, max_batch_tile)
    if n >= 16:
        tn = min(tn, max(8, _round_down(n // 2, 8)))   # >= 2 batch blocks
    if tn >= 8:
        tn = _round_down(tn, 8)
    tn = max(tn, 1)

    # Clamp tn so even a single 128-lane spatial chunk fits the budget.
    bytes_per_row_128 = c_pad * lane_min * itemsize
    max_tn_fit = budget_bytes // bytes_per_row_128
    if max_tn_fit >= 8:
        tn = min(tn, _round_down(max_tn_fit, 8))
    else:
        tn = min(tn, max(1, max_tn_fit))
    tn = max(tn, 1)

    # Biggest spatial chunk that fits: all of HW if possible, otherwise the
    # largest multiple of 128 lanes within budget (tail masked in-kernel).
    full_bytes = tn * c_pad * _round_up(hw, 128) * itemsize
    if full_bytes <= budget_bytes:
        hw_tile = hw
    else:
        n128 = max(1, budget_bytes // (tn * c_pad * lane_min * itemsize))
        hw_tile = min(n128 * 128, hw)
    return tn, hw_tile


# ---------------------------------------------------------------------------
# Wrapper
# ---------------------------------------------------------------------------
def single_layer_nn(x, w, b, *, x_tile_budget_bytes=None, max_batch_tile=256):
    """Forward pass of SingleLayerNN: global average pool + linear head.

    Args:
      x: (N, C, H, W) input, NCHW (same as PyTorch).
      w: (num_classes, C) fc weight (PyTorch nn.Linear layout).
      b: (num_classes,)   fc bias.
    Returns:
      (N, num_classes) logits in x.dtype.
    """
    N, C, H, W = x.shape
    num_classes = w.shape[0]
    HW = H * W
    itemsize = jnp.dtype(x.dtype).itemsize

    # ----- generation-aware VMEM budgets -----
    vmem_cap = _vmem_capacity_bytes()
    if vmem_cap <= 64 * _MIB:            # v7x-class: 64 MiB VMEM per TensorCore
        default_budget = 10 * _MIB
        vmem_limit_floor = 40 * _MIB
    else:                                # v5e / v6e: 128 MiB VMEM
        default_budget = 20 * _MIB
        vmem_limit_floor = 96 * _MIB
    if x_tile_budget_bytes is None:
        x_tile_budget_bytes = default_budget

    # Free reshape (contiguous): spatial dims flattened onto the lane axis.
    x_flat = x.reshape(N, C, HW)

    # Constant weight-layout plumbing (done once, outside the kernel):
    # transpose to (C, num_classes) and pad the class/lane dim to 128.
    nc_pad = _round_up(num_classes, 128)
    w_t = jnp.transpose(w)                                   # (C, num_classes)
    if nc_pad != num_classes:
        w_t = jnp.pad(w_t, ((0, 0), (0, nc_pad - num_classes)))
        b = jnp.pad(b, (0, nc_pad - num_classes))
    b2d = b.reshape(1, nc_pad)

    tn, hw_tile = _pick_tiles(N, C, HW, itemsize, x_tile_budget_bytes,
                              max_batch_tile)
    grid = (pl.cdiv(N, tn), pl.cdiv(HW, hw_tile))
    mask_tail = (HW % hw_tile) != 0

    kernel = functools.partial(_single_layer_nn_kernel,
                               inv_hw=1.0 / HW, hw=HW, hw_tile=hw_tile,
                               mask_tail=mask_tail)

    # Padded-tile VMEM estimate -> scoped-VMEM limit (conservative: assumes
    # double buffering everywhere).
    c_pad = _round_up(C, _sublane(itemsize))
    w_item = jnp.dtype(w_t.dtype).itemsize
    x_block = tn * c_pad * _round_up(hw_tile, 128) * itemsize
    w_block = _round_up(C, _sublane(w_item)) * nc_pad * w_item
    b_block = _sublane(w_item) * nc_pad * w_item
    o_block = _round_up(tn, 8) * nc_pad * itemsize
    acc_block = _round_up(tn, 8) * _round_up(C, 128) * 4
    est = 2 * (x_block + w_block + b_block + o_block) + acc_block
    vmem_limit = int(min(vmem_cap - 8 * _MIB,
                         max(vmem_limit_floor, est + 4 * _MIB)))

    cost = pl.CostEstimate(
        flops=N * C * HW + 2 * N * C * num_classes,
        transcendentals=0,
        bytes_accessed=(x.size * itemsize
                        + w_t.size * w_item
                        + b2d.size * w_item
                        + N * nc_pad * itemsize),
    )

    def _run(single_buffer_resident):
        if single_buffer_resident:
            # Weight/bias never change across the grid: keep ONE VMEM copy
            # instead of the default double buffer.
            w_spec = pl.BlockSpec((C, nc_pad), lambda i, k: (0, 0),
                                  pipeline_mode=pl.Buffered(1))
            b_spec = pl.BlockSpec((1, nc_pad), lambda i, k: (0, 0),
                                  pipeline_mode=pl.Buffered(1))
        else:
            w_spec = pl.BlockSpec((C, nc_pad), lambda i, k: (0, 0))
            b_spec = pl.BlockSpec((1, nc_pad), lambda i, k: (0, 0))
        return pl.pallas_call(
            kernel,
            out_shape=jax.ShapeDtypeStruct((N, nc_pad), x.dtype),
            grid=grid,
            in_specs=[
                # x: tiled over batch (parallel) and spatial chunks (reduction).
                pl.BlockSpec((tn, C, hw_tile), lambda i, k: (i, 0, k)),
                w_spec,
                b_spec,
            ],
            # Same output block across k => resident target, written only at
            # the last reduction step.
            out_specs=pl.BlockSpec((tn, nc_pad), lambda i, k: (i, 0)),
            scratch_shapes=[pltpu.VMEM((tn, C), jnp.float32)],
            compiler_params=pltpu.CompilerParams(
                dimension_semantics=("parallel", "arbitrary"),
                vmem_limit_bytes=vmem_limit,
            ),
            cost_estimate=cost,
        )(x_flat, w_t, b2d)

    try:
        out = _run(single_buffer_resident=True)
        jax.block_until_ready(out)   # surface lowering/runtime issues here
    except Exception:
        # Fallback if this jax version rejects Buffered(1) on resident blocks.
        out = _run(single_buffer_resident=False)

    return out[:, :num_classes] if nc_pad != num_classes else out


# ---------------------------------------------------------------------------
# Self-test
# ---------------------------------------------------------------------------
if __name__ == "__main__":
    # Case 1: small shapes matching the module's forward pass.
    N, C, H, W = 2, 4, 16, 16
    num_classes = 8

    key = jax.random.PRNGKey(0)
    kx, kw, kb = jax.random.split(key, 3)
    x = jax.random.normal(kx, (N, C, H, W), dtype=jnp.float32)
    bound = 1.0 / float(C) ** 0.5  # mimic nn.Linear uniform init
    w = jax.random.uniform(kw, (num_classes, C), jnp.float32, -bound, bound)
    b = jax.random.uniform(kb, (num_classes,), jnp.float32, -bound, bound)

    out = jax.block_until_ready(single_layer_nn(x, w, b))
    ref = jnp.mean(x, axis=(2, 3)) @ w.T + b
    assert out.shape == (N, num_classes)
    assert jnp.allclose(out, ref, atol=1e-5, rtol=1e-5), "mismatch (case 1)"

    # Case 2: forces multiple batch blocks + multiple spatial chunks (exact
    # 128-multiple tail) and the class-lane padding path.
    N2, C2, H2, W2, NC2 = 16, 8, 32, 32, 10
    k2x, k2w, k2b = jax.random.split(jax.random.PRNGKey(1), 3)
    x2 = jax.random.normal(k2x, (N2, C2, H2, W2), dtype=jnp.float32)
    w2 = jax.random.normal(k2w, (NC2, C2), dtype=jnp.float32) * 0.1
    b2 = jax.random.normal(k2b, (NC2,), dtype=jnp.float32) * 0.1
    out2 = jax.block_until_ready(
        single_layer_nn(x2, w2, b2,
                        x_tile_budget_bytes=8 * C2 * 128 * 4,  # force HW tiling
                        max_batch_tile=8))                     # force N tiling
    ref2 = jnp.mean(x2, axis=(2, 3)) @ w2.T + b2
    assert out2.shape == (N2, NC2)
    assert jnp.allclose(out2, ref2, atol=1e-5, rtol=1e-5), "mismatch (case 2)"

    # Case 3: HW not a multiple of the spatial tile -> exercises the masked
    # tail-chunk path (HW = 200, hw_tile forced to 128).
    N3, C3, H3, W3, NC3 = 4, 8, 10, 20, 5
    k3x, k3w, k3b = jax.random.split(jax.random.PRNGKey(2), 3)
    x3 = jax.random.normal(k3x, (N3, C3, H3, W3), dtype=jnp.float32)
    w3 = jax.random.normal(k3w, (NC3, C3), dtype=jnp.float32) * 0.1
    b3 = jax.random.normal(k3b, (NC3,), dtype=jnp.float32) * 0.1
    out3 = jax.block_until_ready(
        single_layer_nn(x3, w3, b3, x_tile_budget_bytes=16 * 1024))
    ref3 = jnp.mean(x3, axis=(2, 3)) @ w3.T + b3
    assert out3.shape == (N3, NC3)
    assert jnp.allclose(out3, ref3, atol=1e-5, rtol=1e-5), "mismatch (case 3)"

    print("KERNEL_OK")
</pallas_src>

<mosaic_0001>
module attributes {stable_mosaic.version = 11 : i64} {
  func.func @_single_layer_nn_kernel(%arg0: i32, %arg1: i32, %arg2: memref<2x4x256xf32, #tpu.memory_space<vmem>>, %arg3: memref<4x128xf32, #tpu.memory_space<vmem>>, %arg4: memref<1x128xf32, #tpu.memory_space<vmem>>, %arg5: memref<2x128xf32, #tpu.memory_space<vmem>>, %arg6: memref<2x4xf32, #tpu.memory_space<vmem>>) attributes {dimension_semantics = [#tpu.dimension_semantics<parallel>, #tpu.dimension_semantics<arbitrary>], iteration_bounds = array<i64: 1, 1>, scalar_prefetch = 0 : i64, scratch_operands = 1 : i64, tpu.core_type = #tpu.core_type<tc>, window_params = [{transform_indices = @transform_0, window_bounds = array<i64: 2, 4, 256>}, {pipeline_mode = #tpu.pipeline_mode<synchronous>, transform_indices = @transform_1, window_bounds = array<i64: 4, 128>}, {pipeline_mode = #tpu.pipeline_mode<synchronous>, transform_indices = @transform_2, window_bounds = array<i64: 1, 128>}, {transform_indices = @transform_3, window_bounds = array<i64: 2, 128>}]} {
    %c0_i32 = arith.constant 0 : i32
    %0 = arith.cmpi eq, %arg1, %c0_i32 : i32
    %1 = arith.extui %0 : i1 to i32
    %c0_i32_0 = arith.constant 0 : i32
    %2 = arith.cmpi ne, %1, %c0_i32_0 : i32
    scf.if %2 {
      %cst_9 = arith.constant 0.000000e+00 : f32
      %11 = vector.broadcast %cst_9 : f32 to vector<2x4xf32>
      %c0_10 = arith.constant 0 : index
      %c0_11 = arith.constant 0 : index
      %12 = vector.load %arg6[%c0_10, %c0_11] : memref<2x4xf32, #tpu.memory_space<vmem>>, vector<2x4xf32>
      tpu.vector_store %arg6[%c0_10, %c0_11], %11 {strides = array<i32>} : memref<2x4xf32, #tpu.memory_space<vmem>>, vector<2x4xf32>,
    } else {
    }
    %c0 = arith.constant 0 : index
    %c0_1 = arith.constant 0 : index
    %c0_2 = arith.constant 0 : index
    %3 = vector.load %arg2[%c0, %c0_1, %c0_2] : memref<2x4x256xf32, #tpu.memory_space<vmem>>, vector<2x4x256xf32>
    %c0_3 = arith.constant 0 : index
    %c0_4 = arith.constant 0 : index
    %4 = vector.load %arg6[%c0_3, %c0_4] : memref<2x4xf32, #tpu.memory_space<vmem>>, vector<2x4xf32>
    %cst = arith.constant dense<0.000000e+00> : vector<2x4xf32>
    %5 = vector.multi_reduction <add>, %3, %cst [2] : vector<2x4x256xf32> to vector<2x4xf32>
    %6 = arith.addf %4, %5 : vector<2x4xf32>
    %c0_5 = arith.constant 0 : index
    %c0_6 = arith.constant 0 : index
    %7 = vector.load %arg6[%c0_5, %c0_6] : memref<2x4xf32, #tpu.memory_space<vmem>>, vector<2x4xf32>
    tpu.vector_store %arg6[%c0_5, %c0_6], %6 {strides = array<i32>} : memref<2x4xf32, #tpu.memory_space<vmem>>, vector<2x4xf32>,
    %c0_i32_7 = arith.constant 0 : i32
    %8 = arith.cmpi eq, %arg1, %c0_i32_7 : i32
    %9 = arith.extui %8 : i1 to i32
    %c0_i32_8 = arith.constant 0 : i32
    %10 = arith.cmpi ne, %9, %c0_i32_8 : i32
    scf.if %10 {
      %c0_9 = arith.constant 0 : index
      %c0_10 = arith.constant 0 : index
      %11 = vector.load %arg6[%c0_9, %c0_10] : memref<2x4xf32, #tpu.memory_space<vmem>>, vector<2x4xf32>
      %cst_11 = arith.constant 3.906250e-03 : f32
      %12 = vector.broadcast %cst_11 : f32 to vector<2x4xf32>
      %13 = arith.mulf %11, %12 : vector<2x4xf32>
      %c0_12 = arith.constant 0 : index
      %c0_13 = arith.constant 0 : index
      %14 = vector.load %arg3[%c0_12, %c0_13] : memref<4x128xf32, #tpu.memory_space<vmem>>, vector<4x128xf32>
      %cst_14 = arith.constant dense<0.000000e+00> : vector<2x128xf32>
      %15 = tpu.matmul %13, %14, %cst_14 {dimension_numbers = #tpu.dot_dimension_numbers<[1], [0], [0], [1], [0, 0, 1, 1], [], []>} : vector<2x4xf32>, vector<4x128xf32>, vector<2x128xf32> -> vector<2x128xf32>
      %c0_15 = arith.constant 0 : index
      %c0_16 = arith.constant 0 : index
      %16 = vector.load %arg4[%c0_15, %c0_16] : memref<1x128xf32, #tpu.memory_space<vmem>>, vector<1x128xf32>
      %17 = vector.broadcast %16 : vector<1x128xf32> to vector<2x128xf32>
      %18 = arith.addf %15, %17 : vector<2x128xf32>
      %c0_17 = arith.constant 0 : index
      %c0_18 = arith.constant 0 : index
      %19 = vector.load %arg5[%c0_17, %c0_18] : memref<2x128xf32, #tpu.memory_space<vmem>>, vector<2x128xf32>
      tpu.vector_store %arg5[%c0_17, %c0_18], %18 {strides = array<i32>} : memref<2x128xf32, #tpu.memory_space<vmem>>, vector<2x128xf32>,
    } else {
    }
    return
  }
  func.func @transform_0(%arg0: i32, %arg1: i32) -> (i32, i32, i32) {
    %c0_i32 = arith.constant 0 : i32
    %c0_i32_0 = arith.constant 0 : i32
    return %arg0, %c0_i32, %arg1 : i32, i32, i32
  }
  func.func @transform_1(%arg0: i32, %arg1: i32) -> (i32, i32) {
    %c0_i32 = arith.constant 0 : i32
    %c0_i32_0 = arith.constant 0 : i32
    %c0_i32_1 = arith.constant 0 : i32
    return %c0_i32, %c0_i32_0 : i32, i32
  }
  func.func @transform_2(%arg0: i32, %arg1: i32) -> (i32, i32) {
    %c0_i32 = arith.constant 0 : i32
    %c0_i32_0 = arith.constant 0 : i32
    %c0_i32_1 = arith.constant 0 : i32
    return %c0_i32, %c0_i32_0 : i32, i32
  }
  func.func @transform_3(%arg0: i32, %arg1: i32) -> (i32, i32) {
    %c0_i32 = arith.constant 0 : i32
    %c0_i32_0 = arith.constant 0 : i32
    return %arg0, %c0_i32 : i32, i32
  }
}

module attributes {stable_mosaic.version = 11 : i64} {
  func.func @_single_layer_nn_kernel(%arg0: i32, %arg1: i32, %arg2: memref<2x4x256xf32, #tpu.memory_space<vmem>>, %arg3: memref<4x128xf32, #tpu.memory_space<vmem>>, %arg4: memref<1x128xf32, #tpu.memory_space<vmem>>, %arg5: memref<2x128xf32, #tpu.memory_space<vmem>>, %arg6: memref<2x4xf32, #tpu.memory_space<vmem>>) attributes {dimension_semantics = [#tpu.dimension_semantics<parallel>, #tpu.dimension_semantics<arbitrary>], iteration_bounds = array<i64: 1, 1>, scalar_prefetch = 0 : i64, scratch_operands = 1 : i64, tpu.core_type = #tpu.core_type<tc>, window_params = [{transform_indices = @transform_0, window_bounds = array<i64: 2, 4, 256>}, {pipeline_mode = #tpu.pipeline_mode<synchronous>, transform_indices = @transform_1, window_bounds = array<i64: 4, 128>}, {pipeline_mode = #tpu.pipeline_mode<synchronous>, transform_indices = @transform_2, window_bounds = array<i64: 1, 128>}, {transform_indices = @transform_3, window_bounds = array<i64: 2, 128>}]} {
    %c0_i32 = arith.constant 0 : i32
    %0 = arith.cmpi eq, %arg1, %c0_i32 : i32
    %1 = arith.extui %0 : i1 to i32
    %c0_i32_0 = arith.constant 0 : i32
    %2 = arith.cmpi ne, %1, %c0_i32_0 : i32
    scf.if %2 {
      %cst_9 = arith.constant 0.000000e+00 : f32
      %11 = vector.broadcast %cst_9 : f32 to vector<2x4xf32>
      %c0_10 = arith.constant 0 : index
      %c0_11 = arith.constant 0 : index
      %12 = vector.load %arg6[%c0_10, %c0_11] : memref<2x4xf32, #tpu.memory_space<vmem>>, vector<2x4xf32>
      tpu.vector_store %arg6[%c0_10, %c0_11], %11 {strides = array<i32>} : memref<2x4xf32, #tpu.memory_space<vmem>>, vector<2x4xf32>,
    } else {
    }
    %c0 = arith.constant 0 : index
    %c0_1 = arith.constant 0 : index
    %c0_2 = arith.constant 0 : index
    %3 = vector.load %arg2[%c0, %c0_1, %c0_2] : memref<2x4x256xf32, #tpu.memory_space<vmem>>, vector<2x4x256xf32>
    %c0_3 = arith.constant 0 : index
    %c0_4 = arith.constant 0 : index
    %4 = vector.load %arg6[%c0_3, %c0_4] : memref<2x4xf32, #tpu.memory_space<vmem>>, vector<2x4xf32>
    %cst = arith.constant dense<0.000000e+00> : vector<2x4xf32>
    %5 = vector.multi_reduction <add>, %3, %cst [2] : vector<2x4x256xf32> to vector<2x4xf32>
    %6 = arith.addf %4, %5 : vector<2x4xf32>
    %c0_5 = arith.constant 0 : index
    %c0_6 = arith.constant 0 : index
    %7 = vector.load %arg6[%c0_5, %c0_6] : memref<2x4xf32, #tpu.memory_space<vmem>>, vector<2x4xf32>
    tpu.vector_store %arg6[%c0_5, %c0_6], %6 {strides = array<i32>} : memref<2x4xf32, #tpu.memory_space<vmem>>, vector<2x4xf32>,
    %c0_i32_7 = arith.constant 0 : i32
    %8 = arith.cmpi eq, %arg1, %c0_i32_7 : i32
    %9 = arith.extui %8 : i1 to i32
    %c0_i32_8 = arith.constant 0 : i32
    %10 = arith.cmpi ne, %9, %c0_i32_8 : i32
    scf.if %10 {
      %c0_9 = arith.constant 0 : index
      %c0_10 = arith.constant 0 : index
      %11 = vector.load %arg6[%c0_9, %c0_10] : memref<2x4xf32, #tpu.memory_space<vmem>>, vector<2x4xf32>
      %cst_11 = arith.constant 3.906250e-03 : f32
      %12 = vector.broadcast %cst_11 : f32 to vector<2x4xf32>
      %13 = arith.mulf %11, %12 : vector<2x4xf32>
      %c0_12 = arith.constant 0 : index
      %c0_13 = arith.constant 0 : index
      %14 = vector.load %arg3[%c0_12, %c0_13] : memref<4x128xf32, #tpu.memory_space<vmem>>, vector<4x128xf32>
      %cst_14 = arith.constant dense<0.000000e+00> : vector<2x128xf32>
      %15 = tpu.matmul %13, %14, %cst_14 {dimension_numbers = #tpu.dot_dimension_numbers<[1], [0], [0], [1], [0, 0, 1, 1], [], []>} : vector<2x4xf32>, vector<4x128xf32>, vector<2x128xf32> -> vector<2x128xf32>
      %c0_15 = arith.constant 0 : index
      %c0_16 = arith.constant 0 : index
      %16 = vector.load %arg4[%c0_15, %c0_16] : memref<1x128xf32, #tpu.memory_space<vmem>>, vector<1x128xf32>
      %17 = vector.broadcast %16 : vector<1x128xf32> to vector<2x128xf32>
      %18 = arith.addf %15, %17 : vector<2x128xf32>
      %c0_17 = arith.constant 0 : index
      %c0_18 = arith.constant 0 : index
      %19 = vector.load %arg5[%c0_17, %c0_18] : memref<2x128xf32, #tpu.memory_space<vmem>>, vector<2x128xf32>
      tpu.vector_store %arg5[%c0_17, %c0_18], %18 {strides = array<i32>} : memref<2x128xf32, #tpu.memory_space<vmem>>, vector<2x128xf32>,
    } else {
    }
    return
  }
  func.func @transform_0(%arg0: i32, %arg1: i32) -> (i32, i32, i32) {
    %c0_i32 = arith.constant 0 : i32
    %c0_i32_0 = arith.constant 0 : i32
    return %arg0, %c0_i32, %arg1 : i32, i32, i32
  }
  func.func @transform_1(%arg0: i32, %arg1: i32) -> (i32, i32) {
    %c0_i32 = arith.constant 0 : i32
    %c0_i32_0 = arith.constant 0 : i32
    %c0_i32_1 = arith.constant 0 : i32
    return %c0_i32, %c0_i32_0 : i32, i32
  }
  func.func @transform_2(%arg0: i32, %arg1: i32) -> (i32, i32) {
    %c0_i32 = arith.constant 0 : i32
    %c0_i32_0 = arith.constant 0 : i32
    %c0_i32_1 = arith.constant 0 : i32
    return %c0_i32, %c0_i32_0 : i32, i32
  }
  func.func @transform_3(%arg0: i32, %arg1: i32) -> (i32, i32) {
    %c0_i32 = arith.constant 0 : i32
    %c0_i32_0 = arith.constant 0 : i32
    return %arg0, %c0_i32 : i32, i32
  }
}

</mosaic_0001>

<llo_original>
// kernel: tpu_custom_call.1
$region0: #{tpu_custom_call.1}
  #allocation0 [shape = 'u32[]', space=smem, size = 0x4, offset = 0x4, fixed_abs, tag = 'smem constant byte address 0x4 - core index']
  #allocation1 [shape = 'u32[144,128]{1,0:T(1,128)}', space=vmem, size = 0x12000, scoped, tag = 'internal scratch']
  #allocation2 [shape = 'f32[2,4]{1,0:T(2,128)}', space=vmem, size = 0x400, scoped, tag = 'scratch operand']
  %s0 = inlined_call_operand.hbm [shape: f32[2,4,256], index: 0, kind: input, shape index: {}]
  %s1 = inlined_call_operand.hbm [shape: f32[4,128], index: 1, kind: input, shape index: {}]
  %s2 = inlined_call_operand.hbm [shape: f32[1,128], index: 2, kind: input, shape index: {}]
  %s3 = inlined_call_operand.hbm [shape: f32[2,128], index: 3, kind: output, shape index: {}]
  %s4 = sld [smem:[#allocation0]]
  $region42: #{tpu_custom_call.1} parent=0
    _
  %s6 = ssub.s32 1, %s4
  %s7 = scalar_select 0, %s6, %s4
  $region1: #{tpu_custom_call.1} parent=0
    #allocation3 [shape = 'u8[8192]{0}', space=vmem, size = 0x2000, scoped, tag = 'input window, operand 0, single buffered']
    #allocation4 [shape = 's32[1]{0}', space=sflag, size = 0x4, scoped, tag = 'scoped memory for tpu_custom_call.1']
    #allocation5 [shape = 's32[1]{0}', space=sflag, size = 0x4, scoped, tag = 'scoped memory for tpu_custom_call.1']
    #allocation6 [shape = 'u8[2048]{0}', space=vmem, size = 0x800, scoped, tag = 'input window, operand 1, single buffered']
    #allocation7 [shape = 's32[1]{0}', space=sflag, size = 0x4, scoped, tag = 'scoped memory for tpu_custom_call.1']
    #allocation8 [shape = 'u8[512]{0}', space=vmem, size = 0x400, scoped, tag = 'input window, operand 2, single buffered']
    #allocation9 [shape = 'u8[1024]{0}', space=vmem, size = 0x400, scoped, tag = 'output window, operand 0, single buffered']
    %8 = vsyncpa [#allocation4], 0
    %9 = vsyncpa [#allocation7], 0
    %10 = vsyncpa [#allocation5], 0
    // Predicated region
    $region2: #{tpu_custom_call.1} parent=1 // pred_check
      _
    $region3: #{tpu_custom_call.1} parent=1 // pred_check_branch
      %12 = sbr.rel (0) target = $region5
    $region4: #{tpu_custom_call.1} parent=1 // pred_region
      %s14 = ssub.s32 256, 256
      %15 = vsyncadd [#allocation4], %s14
      %s16 = sshll.u32 [#allocation3], 4
      %s17 = int_to_ptr.vmem [resolvable:$true] %s16
      %22 = dma.hbm_to_vmem [thread:$0]  %s0, 256, %s17, [#allocation4], 128, 128, 8
    $region5: #{tpu_custom_call.1} parent=1 // pred_fallthru
      _
    // Predicated region
    $region6: #{tpu_custom_call.1} parent=1 // pred_check
      _
    $region7: #{tpu_custom_call.1} parent=1 // pred_check_branch
      %24 = sbr.rel (0) target = $region9
    $region8: #{tpu_custom_call.1} parent=1 // pred_region
      %s26 = ssub.s32 64, 64
      %27 = vsyncadd [#allocation7], %s26
      %s29 = sshll.u32 [#allocation6], 4
      %s30 = int_to_ptr.vmem [resolvable:$true] %s29
      %32 = dma.hbm_to_vmem [thread:$0]  %s1, 64, %s30, [#allocation7]
    $region9: #{tpu_custom_call.1} parent=1 // pred_fallthru
      _
    // Predicated region
    $region10: #{tpu_custom_call.1} parent=1 // pred_check
      _
    $region11: #{tpu_custom_call.1} parent=1 // pred_check_branch
      %34 = sbr.rel (0) target = $region13
    $region12: #{tpu_custom_call.1} parent=1 // pred_region
      %s36 = ssub.s32 16, 16
      %37 = vsyncadd [#allocation7], %s36
      %s39 = sshll.u32 [#allocation8], 4
      %s40 = int_to_ptr.vmem [resolvable:$true] %s39
      %42 = dma.hbm_to_vmem [thread:$0]  %s2, 16, %s40, [#allocation7]
    $region13: #{tpu_custom_call.1} parent=1 // pred_fallthru
      _
    // Predicated region
    $region14: #{tpu_custom_call.1} parent=1 // pred_check
      _
    $region15: #{tpu_custom_call.1} parent=1 // pred_check_branch
      %44 = sbr.rel (0) target = $region17
    $region16: #{tpu_custom_call.1} parent=1 // pred_region
      %45 = dma.done [#allocation4], 256
    $region17: #{tpu_custom_call.1} parent=1 // pred_fallthru
      _
    // Predicated region
    $region18: #{tpu_custom_call.1} parent=1 // pred_check
      _
    $region19: #{tpu_custom_call.1} parent=1 // pred_check_branch
      %47 = sbr.rel (0) target = $region21
    $region20: #{tpu_custom_call.1} parent=1 // pred_region
      %48 = dma.done [#allocation7], 64
    $region21: #{tpu_custom_call.1} parent=1 // pred_fallthru
      _
    // Predicated region
    $region22: #{tpu_custom_call.1} parent=1 // pred_check
      _
    $region23: #{tpu_custom_call.1} parent=1 // pred_check_branch
      %50 = sbr.rel (0) target = $region25
    $region24: #{tpu_custom_call.1} parent=1 // pred_region
      %51 = dma.done [#allocation7], 16
    $region25: #{tpu_custom_call.1} parent=1 // pred_fallthru
      _
    %p52 = scmp.eq.s32.totalorder 0, 0
    // Predicated region
    $region26: #{tpu_custom_call.1} parent=1 // pred_check
      %p53 = pneg %p52
    $region27: #{tpu_custom_call.1} parent=1 // pred_check_branch
      %55 = sbr.rel (%p53) target = $region29
    $region28: #{tpu_custom_call.1} parent=1 // pred_region
      %vm56 = vcmask 25600
      %57 = vst.msk [vmem:[#allocation2] sm:$0x3] %vm56, 0.0
    $region29: #{tpu_custom_call.1} parent=1 // pred_fallthru
      _
    %v58 = vld [vmem:[#allocation3] sm:$0xff]
    %v59 = vld [vmem:[#allocation3 + $0x8] sm:$0xff]
    %v60 = vld [vmem:[#allocation2] sm:$0x3]
    %v63 = vcombine.high %v58, %v58
    %v64 = vcombine.high %v59, %v59
    %vm67 = vcmask 1043456
    %v68 = vsel %vm67, %v58, 0.0
    %v69 = vsel %vm67, %v63, 0.0
    %v70 = vadd.f32 %v68, %v69
    %71 = vadd.xlane.f32.xlu0 %v70
    %v72 = vpop.xlane.xlu0 %71
    %v73 = vsel %vm67, %v59, 0.0
    %v74 = vsel %vm67, %v64, 0.0
    %v75 = vadd.f32 %v73, %v74
    %76 = vadd.xlane.f32.xlu0 %v75
    %v77 = vpop.xlane.xlu0 %76
    %v80 = vlaneseq
    %v81 = vand.u32 %v80, 127
    %v82 = vlaneseq
    %v83 = vshrl.u32 %v82, 7
    %v84 = vsub.s32 %v81, %v83
    %v85 = vrot.slane %v72, %v84
    %v86 = vlaneseq
    %v87 = vshrl.u32 %v86, 7
    %v88 = vsub.s32 %v81, %v87
    %v89 = vrot.slane %v77, %v88
    %vm90 = vcmask 1041409
    %v91 = vsel %vm90, %v89, %v85
    %v93 = vadd.f32 %v60, %v91
    %vm94 = vcmask 25600
    %95 = vst.msk [vmem:[#allocation2] sm:$0x3] %vm94, %v93
    // Predicated region
    $region30: #{tpu_custom_call.1} parent=1 // pred_check
      %p96 = pneg %p52
    $region31: #{tpu_custom_call.1} parent=1 // pred_check_branch
      %98 = sbr.rel (%p96) target = $region33
    $region32: #{tpu_custom_call.1} parent=1 // pred_region
      %v99 = vld [vmem:[#allocation2] sm:$0x3]
      %v100 = vmul.f32 %v99, 0.00390625
      %v101 = vld [vmem:[#allocation6] sm:$0xf]
      %v102 = vld [vmem:[#allocation8] sm:$0x1]
      %v104 = vlaneseq
      %v105 = vshrl.u32 %v104, 7
      %v106 = vsub.s32 0, %v105
      %v107 = vrot.slane %v102, %v106
      %vm109 = vcmask 31744
      %v111 = vsel %vm109, %v100, 0
      %v114 = vsel %vm67, %v101, 0
      %116 = vmatprep.subr.mxu0 0.0
      %117 = vmatpush1.msra.mxu0 %v114
      %118 = vmatprep.subr.mxu0 0.0
      %119 = vmatpush1.msra.mxu0 0.0
      %120 = vmatprep.subr.mxu0 0.0
      %121 = vmatpush1.msra.mxu0 0.0
      %122 = vmatprep.subr.mxu0 0.0
      %123 = vmatpush1.msra.mxu0 0.0
      %124 = vmatprep.subr.mxu0 0.0
      %125 = vmatpush1.msra.mxu0 0.0
      %126 = vmatprep.subr.mxu0 0.0
      %127 = vmatpush1.msra.mxu0 0.0
      %128 = vmatprep.subr.mxu0 0.0
      %129 = vmatpush1.msra.mxu0 0.0
      %130 = vmatprep.subr.mxu0 0.0
      %131 = vmatpush1.msra.mxu0 0.0
      %132 = vmatprep.subr.mxu0 0.0
      %133 = vmatpush1.msra.mxu0 0.0
      %134 = vmatprep.subr.mxu0 0.0
      %135 = vmatpush1.msra.mxu0 0.0
      %136 = vmatprep.subr.mxu0 0.0
      %137 = vmatpush1.msra.mxu0 0.0
      %138 = vmatprep.subr.mxu0 0.0
      %139 = vmatpush1.msra.mxu0 0.0
      %140 = vmatprep.subr.mxu0 0.0
      %141 = vmatpush1.msra.mxu0 0.0
      %142 = vmatprep.subr.mxu0 0.0
      %143 = vmatpush1.msra.mxu0 0.0
      %144 = vmatprep.subr.mxu0 0.0
      %145 = vmatpush1.msra.mxu0 0.0
      %146 = vmatprep.subr.mxu0 0.0
      %147 = vmatpush1.msra.mxu0 0.0
      %148 = vmatprep.subr.mxu0 0.0
      %149 = vmatpush1.msra.mxu0 0.0
      %150 = vmatprep.subr.mxu0 0.0
      %151 = vmatpush1.msra.mxu0 0.0
      %152 = vmatprep.subr.mxu0 0.0
      %153 = vmatpush1.msra.mxu0 0.0
      %154 = vmatprep.subr.mxu0 0.0
      %155 = vmatpush1.msra.mxu0 0.0
      %156 = vmatprep.subr.mxu0 0.0
      %157 = vmatpush1.msra.mxu0 0.0
      %158 = vmatprep.subr.mxu0 0.0
      %159 = vmatpush1.msra.mxu0 0.0
      %160 = vmatprep.subr.mxu0 0.0
      %161 = vmatpush1.msra.mxu0 0.0
      %162 = vmatprep.subr.mxu0 0.0
      %163 = vmatpush1.msra.mxu0 0.0
      %164 = vmatprep.subr.mxu0 0.0
      %165 = vmatpush1.msra.mxu0 0.0
      %166 = vmatprep.subr.mxu0 0.0
      %167 = vmatpush1.msra.mxu0 0.0
      %168 = vmatprep.subr.mxu0 0.0
      %169 = vmatpush1.msra.mxu0 0.0
      %170 = vmatprep.subr.mxu0 0.0
      %171 = vmatpush1.msra.mxu0 0.0
      %172 = vmatprep.subr.mxu0 0.0
      %173 = vmatpush1.msra.mxu0 0.0
      %174 = vmatprep.subr.mxu0 0.0
      %175 = vmatpush1.msra.mxu0 0.0
      %176 = vmatprep.subr.mxu0 0.0
      %177 = vmatpush1.msra.mxu0 0.0
      %178 = vmatprep.subr.mxu0 0.0
      %179 = vmatpush1.msra.mxu0 0.0
      %180 = vmatprep.mubr.f32.mxu0 0.0
      %181 = vmatmul.mubr.f32.gmra.mrb[0].mxu0 %v111
      %v182 = vpop.f32.mrb[0].mxu0
      %v183 = vadd.f32 %v107, %v182
      %v184 = vpop.f32.mrb[0].mxu0
      %185 = vdwg.mxu0
      %186 = vst [vmem:[#allocation9] sm:$0x3] %v183
    $region33: #{tpu_custom_call.1} parent=1 // pred_fallthru
      _
    // Predicated region
    $region34: #{tpu_custom_call.1} parent=1 // pred_check
      _
    $region35: #{tpu_custom_call.1} parent=1 // pred_check_branch
      %188 = sbr.rel (0) target = $region37
    $region36: #{tpu_custom_call.1} parent=1 // pred_region
      %s190 = ssub.s32 32, 32
      %191 = vsyncadd [#allocation5], %s190
      %s193 = sshll.u32 [#allocation9], 4
      %s194 = int_to_ptr.vmem [resolvable:$true] %s193
      %196 = dma.vmem_to_hbm [thread:$0]  %s194, 32, %s3, [#allocation5]
    $region37: #{tpu_custom_call.1} parent=1 // pred_fallthru
      _
    // Predicated region
    $region38: #{tpu_custom_call.1} parent=1 // pred_check
      _
    $region39: #{tpu_custom_call.1} parent=1 // pred_check_branch
      %198 = sbr.rel (0) target = $region41
    $region40: #{tpu_custom_call.1} parent=1 // pred_region
      %199 = dma.done [#allocation5], 32
    $region41: #{tpu_custom_call.1} parent=1 // pred_fallthru
      _
    %200 = vsyncpa [#allocation4], 1
    %201 = vsyncpa [#allocation7], 1
    %202 = vsyncpa [#allocation5], 1

// kernel: tpu_custom_call.1
$region0: #{tpu_custom_call.1}
  #allocation0 [shape = 'u32[]', space=smem, size = 0x4, offset = 0x4, fixed_abs, tag = 'smem constant byte address 0x4 - core index']
  #allocation1 [shape = 'u32[144,128]{1,0:T(1,128)}', space=vmem, size = 0x12000, scoped, tag = 'internal scratch']
  #allocation2 [shape = 'f32[2,4]{1,0:T(2,128)}', space=vmem, size = 0x400, scoped, tag = 'scratch operand']
  %s0 = inlined_call_operand.hbm [shape: f32[2,4,256], index: 0, kind: input, shape index: {}]
  %s1 = inlined_call_operand.hbm [shape: f32[4,128], index: 1, kind: input, shape index: {}]
  %s2 = inlined_call_operand.hbm [shape: f32[1,128], index: 2, kind: input, shape index: {}]
  %s3 = inlined_call_operand.hbm [shape: f32[2,128], index: 3, kind: output, shape index: {}]
  %s4 = sld [smem:[#allocation0]]
  $region42: #{tpu_custom_call.1} parent=0
    _
  %s6 = ssub.s32 1, %s4
  %s7 = scalar_select 0, %s6, %s4
  $region1: #{tpu_custom_call.1} parent=0
    #allocation3 [shape = 'u8[8192]{0}', space=vmem, size = 0x2000, scoped, tag = 'input window, operand 0, single buffered']
    #allocation4 [shape = 's32[1]{0}', space=sflag, size = 0x4, scoped, tag = 'scoped memory for tpu_custom_call.1']
    #allocation5 [shape = 's32[1]{0}', space=sflag, size = 0x4, scoped, tag = 'scoped memory for tpu_custom_call.1']
    #allocation6 [shape = 'u8[2048]{0}', space=vmem, size = 0x800, scoped, tag = 'input window, operand 1, single buffered']
    #allocation7 [shape = 's32[1]{0}', space=sflag, size = 0x4, scoped, tag = 'scoped memory for tpu_custom_call.1']
    #allocation8 [shape = 'u8[512]{0}', space=vmem, size = 0x400, scoped, tag = 'input window, operand 2, single buffered']
    #allocation9 [shape = 'u8[1024]{0}', space=vmem, size = 0x400, scoped, tag = 'output window, operand 0, single buffered']
    %8 = vsyncpa [#allocation4], 0
    %9 = vsyncpa [#allocation7], 0
    %10 = vsyncpa [#allocation5], 0
    // Predicated region
    $region2: #{tpu_custom_call.1} parent=1 // pred_check
      _
    $region3: #{tpu_custom_call.1} parent=1 // pred_check_branch
      %12 = sbr.rel (0) target = $region5
    $region4: #{tpu_custom_call.1} parent=1 // pred_region
      %s14 = ssub.s32 256, 256
      %15 = vsyncadd [#allocation4], %s14
      %s16 = sshll.u32 [#allocation3], 4
      %s17 = int_to_ptr.vmem [resolvable:$true] %s16
      %22 = dma.hbm_to_vmem [thread:$0]  %s0, 256, %s17, [#allocation4], 128, 128, 8
    $region5: #{tpu_custom_call.1} parent=1 // pred_fallthru
      _
    // Predicated region
    $region6: #{tpu_custom_call.1} parent=1 // pred_check
      _
    $region7: #{tpu_custom_call.1} parent=1 // pred_check_branch
      %24 = sbr.rel (0) target = $region9
    $region8: #{tpu_custom_call.1} parent=1 // pred_region
      %s26 = ssub.s32 64, 64
      %27 = vsyncadd [#allocation7], %s26
      %s29 = sshll.u32 [#allocation6], 4
      %s30 = int_to_ptr.vmem [resolvable:$true] %s29
      %32 = dma.hbm_to_vmem [thread:$0]  %s1, 64, %s30, [#allocation7]
    $region9: #{tpu_custom_call.1} parent=1 // pred_fallthru
      _
    // Predicated region
    $region10: #{tpu_custom_call.1} parent=1 // pred_check
      _
    $region11: #{tpu_custom_call.1} parent=1 // pred_check_branch
      %34 = sbr.rel (0) target = $region13
    $region12: #{tpu_custom_call.1} parent=1 // pred_region
      %s36 = ssub.s32 16, 16
      %37 = vsyncadd [#allocation7], %s36
      %s39 = sshll.u32 [#allocation8], 4
      %s40 = int_to_ptr.vmem [resolvable:$true] %s39
      %42 = dma.hbm_to_vmem [thread:$0]  %s2, 16, %s40, [#allocation7]
    $region13: #{tpu_custom_call.1} parent=1 // pred_fallthru
      _
    // Predicated region
    $region14: #{tpu_custom_call.1} parent=1 // pred_check
      _
    $region15: #{tpu_custom_call.1} parent=1 // pred_check_branch
      %44 = sbr.rel (0) target = $region17
    $region16: #{tpu_custom_call.1} parent=1 // pred_region
      %45 = dma.done [#allocation4], 256
    $region17: #{tpu_custom_call.1} parent=1 // pred_fallthru
      _
    // Predicated region
    $region18: #{tpu_custom_call.1} parent=1 // pred_check
      _
    $region19: #{tpu_custom_call.1} parent=1 // pred_check_branch
      %47 = sbr.rel (0) target = $region21
    $region20: #{tpu_custom_call.1} parent=1 // pred_region
      %48 = dma.done [#allocation7], 64
    $region21: #{tpu_custom_call.1} parent=1 // pred_fallthru
      _
    // Predicated region
    $region22: #{tpu_custom_call.1} parent=1 // pred_check
      _
    $region23: #{tpu_custom_call.1} parent=1 // pred_check_branch
      %50 = sbr.rel (0) target = $region25
    $region24: #{tpu_custom_call.1} parent=1 // pred_region
      %51 = dma.done [#allocation7], 16
    $region25: #{tpu_custom_call.1} parent=1 // pred_fallthru
      _
    %p52 = scmp.eq.s32.totalorder 0, 0
    // Predicated region
    $region26: #{tpu_custom_call.1} parent=1 // pred_check
      %p53 = pneg %p52
    $region27: #{tpu_custom_call.1} parent=1 // pred_check_branch
      %55 = sbr.rel (%p53) target = $region29
    $region28: #{tpu_custom_call.1} parent=1 // pred_region
      %vm56 = vcmask 25600
      %57 = vst.msk [vmem:[#allocation2] sm:$0x3] %vm56, 0.0
    $region29: #{tpu_custom_call.1} parent=1 // pred_fallthru
      _
    %v58 = vld [vmem:[#allocation3] sm:$0xff]
    %v59 = vld [vmem:[#allocation3 + $0x8] sm:$0xff]
    %v60 = vld [vmem:[#allocation2] sm:$0x3]
    %v63 = vcombine.high %v58, %v58
    %v64 = vcombine.high %v59, %v59
    %vm67 = vcmask 1043456
    %v68 = vsel %vm67, %v58, 0.0
    %v69 = vsel %vm67, %v63, 0.0
    %v70 = vadd.f32 %v68, %v69
    %71 = vadd.xlane.f32.xlu0 %v70
    %v72 = vpop.xlane.xlu0 %71
    %v73 = vsel %vm67, %v59, 0.0
    %v74 = vsel %vm67, %v64, 0.0
    %v75 = vadd.f32 %v73, %v74
    %76 = vadd.xlane.f32.xlu0 %v75
    %v77 = vpop.xlane.xlu0 %76
    %v80 = vlaneseq
    %v81 = vand.u32 %v80, 127
    %v82 = vlaneseq
    %v83 = vshrl.u32 %v82, 7
    %v84 = vsub.s32 %v81, %v83
    %v85 = vrot.slane %v72, %v84
    %v86 = vlaneseq
    %v87 = vshrl.u32 %v86, 7
    %v88 = vsub.s32 %v81, %v87
    %v89 = vrot.slane %v77, %v88
    %vm90 = vcmask 1041409
    %v91 = vsel %vm90, %v89, %v85
    %v93 = vadd.f32 %v60, %v91
    %vm94 = vcmask 25600
    %95 = vst.msk [vmem:[#allocation2] sm:$0x3] %vm94, %v93
    // Predicated region
    $region30: #{tpu_custom_call.1} parent=1 // pred_check
      %p96 = pneg %p52
    $region31: #{tpu_custom_call.1} parent=1 // pred_check_branch
      %98 = sbr.rel (%p96) target = $region33
    $region32: #{tpu_custom_call.1} parent=1 // pred_region
      %v99 = vld [vmem:[#allocation2] sm:$0x3]
      %v100 = vmul.f32 %v99, 0.00390625
      %v101 = vld [vmem:[#allocation6] sm:$0xf]
      %v102 = vld [vmem:[#allocation8] sm:$0x1]
      %v104 = vlaneseq
      %v105 = vshrl.u32 %v104, 7
      %v106 = vsub.s32 0, %v105
      %v107 = vrot.slane %v102, %v106
      %vm109 = vcmask 31744
      %v111 = vsel %vm109, %v100, 0
      %v114 = vsel %vm67, %v101, 0
      %116 = vmatprep.subr.mxu0 0.0
      %117 = vmatpush1.msra.mxu0 %v114
      %118 = vmatprep.subr.mxu0 0.0
      %119 = vmatpush1.msra.mxu0 0.0
      %120 = vmatprep.subr.mxu0 0.0
      %121 = vmatpush1.msra.mxu0 0.0
      %122 = vmatprep.subr.mxu0 0.0
      %123 = vmatpush1.msra.mxu0 0.0
      %124 = vmatprep.subr.mxu0 0.0
      %125 = vmatpush1.msra.mxu0 0.0
      %126 = vmatprep.subr.mxu0 0.0
      %127 = vmatpush1.msra.mxu0 0.0
      %128 = vmatprep.subr.mxu0 0.0
      %129 = vmatpush1.msra.mxu0 0.0
      %130 = vmatprep.subr.mxu0 0.0
      %131 = vmatpush1.msra.mxu0 0.0
      %132 = vmatprep.subr.mxu0 0.0
      %133 = vmatpush1.msra.mxu0 0.0
      %134 = vmatprep.subr.mxu0 0.0
      %135 = vmatpush1.msra.mxu0 0.0
      %136 = vmatprep.subr.mxu0 0.0
      %137 = vmatpush1.msra.mxu0 0.0
      %138 = vmatprep.subr.mxu0 0.0
      %139 = vmatpush1.msra.mxu0 0.0
      %140 = vmatprep.subr.mxu0 0.0
      %141 = vmatpush1.msra.mxu0 0.0
      %142 = vmatprep.subr.mxu0 0.0
      %143 = vmatpush1.msra.mxu0 0.0
      %144 = vmatprep.subr.mxu0 0.0
      %145 = vmatpush1.msra.mxu0 0.0
      %146 = vmatprep.subr.mxu0 0.0
      %147 = vmatpush1.msra.mxu0 0.0
      %148 = vmatprep.subr.mxu0 0.0
      %149 = vmatpush1.msra.mxu0 0.0
      %150 = vmatprep.subr.mxu0 0.0
      %151 = vmatpush1.msra.mxu0 0.0
      %152 = vmatprep.subr.mxu0 0.0
      %153 = vmatpush1.msra.mxu0 0.0
      %154 = vmatprep.subr.mxu0 0.0
      %155 = vmatpush1.msra.mxu0 0.0
      %156 = vmatprep.subr.mxu0 0.0
      %157 = vmatpush1.msra.mxu0 0.0
      %158 = vmatprep.subr.mxu0 0.0
      %159 = vmatpush1.msra.mxu0 0.0
      %160 = vmatprep.subr.mxu0 0.0
      %161 = vmatpush1.msra.mxu0 0.0
      %162 = vmatprep.subr.mxu0 0.0
      %163 = vmatpush1.msra.mxu0 0.0
      %164 = vmatprep.subr.mxu0 0.0
      %165 = vmatpush1.msra.mxu0 0.0
      %166 = vmatprep.subr.mxu0 0.0
      %167 = vmatpush1.msra.mxu0 0.0
      %168 = vmatprep.subr.mxu0 0.0
      %169 = vmatpush1.msra.mxu0 0.0
      %170 = vmatprep.subr.mxu0 0.0
      %171 = vmatpush1.msra.mxu0 0.0
      %172 = vmatprep.subr.mxu0 0.0
      %173 = vmatpush1.msra.mxu0 0.0
      %174 = vmatprep.subr.mxu0 0.0
      %175 = vmatpush1.msra.mxu0 0.0
      %176 = vmatprep.subr.mxu0 0.0
      %177 = vmatpush1.msra.mxu0 0.0
      %178 = vmatprep.subr.mxu0 0.0
      %179 = vmatpush1.msra.mxu0 0.0
      %180 = vmatprep.mubr.f32.mxu0 0.0
      %181 = vmatmul.mubr.f32.gmra.mrb[0].mxu0 %v111
      %v182 = vpop.f32.mrb[0].mxu0
      %v183 = vadd.f32 %v107, %v182
      %v184 = vpop.f32.mrb[0].mxu0
      %185 = vdwg.mxu0
      %186 = vst [vmem:[#allocation9] sm:$0x3] %v183
    $region33: #{tpu_custom_call.1} parent=1 // pred_fallthru
      _
    // Predicated region
    $region34: #{tpu_custom_call.1} parent=1 // pred_check
      _
    $region35: #{tpu_custom_call.1} parent=1 // pred_check_branch
      %188 = sbr.rel (0) target = $region37
    $region36: #{tpu_custom_call.1} parent=1 // pred_region
      %s190 = ssub.s32 32, 32
      %191 = vsyncadd [#allocation5], %s190
      %s193 = sshll.u32 [#allocation9], 4
      %s194 = int_to_ptr.vmem [resolvable:$true] %s193
      %196 = dma.vmem_to_hbm [thread:$0]  %s194, 32, %s3, [#allocation5]
    $region37: #{tpu_custom_call.1} parent=1 // pred_fallthru
      _
    // Predicated region
    $region38: #{tpu_custom_call.1} parent=1 // pred_check
      _
    $region39: #{tpu_custom_call.1} parent=1 // pred_check_branch
      %198 = sbr.rel (0) target = $region41
    $region40: #{tpu_custom_call.1} parent=1 // pred_region
      %199 = dma.done [#allocation5], 32
    $region41: #{tpu_custom_call.1} parent=1 // pred_fallthru
      _
    %200 = vsyncpa [#allocation4], 1
    %201 = vsyncpa [#allocation7], 1
    %202 = vsyncpa [#allocation5], 1

</llo_original>
